<compile_context>
chip_gen: v7x
topology: tpu7x:2x2x1
jax: 0.10.0
libtpu: 0.0.40
codegen_flags: <defaults>
</compile_context>

<pallas_src>
import functools

import jax
import jax.numpy as jnp
from jax.experimental import pallas as pl
from jax.experimental.pallas import tpu as pltpu

LANE = 128  # padded width of every layer (all real widths are <= 127)


def _mlp_kernel(x_ref, w_ref, o_ref, *, n_layers, compute_dtype):
    """Fused forward pass over one packed weight slab.

    x_ref: (tm, LANE)              activations; real features in cols [:in],
                                   1.0 in col LANE-1 (bias column).
    w_ref: (LANE, n_layers*LANE)   packed zero-padded weights; row LANE-1 of
                                   block j holds bias_j, and [LANE-1, LANE-1]
                                   of each block is 1 so the ones-column (and
                                   hence the bias term) survives the chain.
    o_ref: (tm, LANE)              lane-dense output; real classes in [:C].
    """
    h = x_ref[...].astype(compute_dtype)
    for j in range(n_layers):
        w = w_ref[:, j * LANE:(j + 1) * LANE]       # static, 128-aligned slice
        h = jnp.dot(h, w, preferred_element_type=jnp.float32)
        if j < n_layers - 1:
            h = jnp.maximum(h, 0.0).astype(compute_dtype)   # ReLU
    o_ref[...] = h.astype(o_ref.dtype)


def pack_params(params, compute_dtype=jnp.bfloat16):
    """Pack [(W_j, b_j)] into one (LANE, n_layers*LANE) lane-dense slab.

    slab[:in_j,   jL : jL+out_j]   = W_j
    slab[LANE-1,  jL : jL+out_j]   = b_j        (bias row, hit by ones-column)
    slab[LANE-1,  jL + LANE-1]     = 1.0        (propagate the ones-column)
    """
    n_layers = len(params)
    slab = jnp.zeros((LANE, n_layers * LANE), jnp.float32)
    for j, (w, b) in enumerate(params):
        fan_in, fan_out = w.shape
        assert fan_in < LANE and fan_out < LANE
        b = jnp.reshape(b, (fan_out,)).astype(jnp.float32)
        col0 = j * LANE
        slab = slab.at[:fan_in, col0:col0 + fan_out].set(w.astype(jnp.float32))
        slab = slab.at[LANE - 1, col0:col0 + fan_out].set(b)
        slab = slab.at[LANE - 1, col0 + LANE - 1].set(1.0)
    return slab.astype(compute_dtype)


def mlp_forward(x, w_slab, out_dim, *, compute_dtype=jnp.bfloat16,
                block_batch=512):
    """x: (batch, in_dim) f32, w_slab: packed slab from pack_params."""
    batch, in_dim = x.shape
    n_layers = w_slab.shape[1] // LANE
    assert in_dim < LANE

    # Batch tiling: multiple-of-8 sublanes; tile size capped so (x + out)
    # double-buffers stay far below the 32 MiB scoped-VMEM default on any gen.
    batch8 = max(8, -(-batch // 8) * 8)
    tm = min(block_batch, batch8)
    batch_pad = -(-batch8 // tm) * tm

    # Lane-dense input slab: real features in [:in_dim], 1.0 in the bias lane.
    xp = jnp.zeros((batch_pad, LANE), compute_dtype)
    xp = xp.at[:batch, :in_dim].set(x.astype(compute_dtype))
    xp = xp.at[:, LANE - 1].set(jnp.asarray(1.0, compute_dtype))

    grid = (batch_pad // tm,)
    kernel = functools.partial(_mlp_kernel, n_layers=n_layers,
                               compute_dtype=compute_dtype)

    flops = 2 * batch_pad * LANE * LANE * n_layers
    bytes_accessed = (xp.size * xp.dtype.itemsize
                      + w_slab.size * w_slab.dtype.itemsize
                      + batch_pad * LANE * 4)

    out = pl.pallas_call(
        kernel,
        out_shape=jax.ShapeDtypeStruct((batch_pad, LANE), jnp.float32),
        grid=grid,
        in_specs=[
            pl.BlockSpec((tm, LANE), lambda i: (i, 0)),                # x tile
            pl.BlockSpec((LANE, n_layers * LANE), lambda i: (0, 0)),   # weights resident
        ],
        out_specs=pl.BlockSpec((tm, LANE), lambda i: (i, 0)),
        compiler_params=pltpu.CompilerParams(
            dimension_semantics=("parallel",)),
        cost_estimate=pl.CostEstimate(flops=flops, transcendentals=0,
                                      bytes_accessed=bytes_accessed),
    )(xp, w_slab)

    return out[:batch, :out_dim]


def init_params(key, input_dim, layer_sizes, output_dim):
    """Deterministic PyTorch-style init: U(-1/sqrt(fan_in), 1/sqrt(fan_in))."""
    dims = [input_dim] + list(layer_sizes) + [output_dim]
    params = []
    for i in range(len(dims) - 1):
        fan_in, fan_out = dims[i], dims[i + 1]
        key, kw, kb = jax.random.split(key, 3)
        bound = 1.0 / jnp.sqrt(float(fan_in))
        w = jax.random.uniform(kw, (fan_in, fan_out), jnp.float32,
                               minval=-bound, maxval=bound)
        b = jax.random.uniform(kb, (fan_out,), jnp.float32,
                               minval=-bound, maxval=bound)
        params.append((w, b))
    return params


def reference_forward(x, params, compute_dtype=jnp.float32):
    """Pure-JAX reference with the same operand dtype / f32 accumulation."""
    h = x.astype(compute_dtype)
    for idx, (w, b) in enumerate(params):
        h = jnp.dot(h, w.astype(compute_dtype),
                    preferred_element_type=jnp.float32)
        h = h + jnp.reshape(b, (1, -1)).astype(compute_dtype).astype(jnp.float32)
        if idx < len(params) - 1:
            h = jnp.maximum(h, 0.0).astype(compute_dtype)
    return h


if __name__ == "__main__":
    # Small shapes consistent with a star-type classifier MLP:
    # 6 input features, 5 hidden layers, 6 output classes.
    batch = 8
    input_dim = 6
    layer_sizes = (32, 64, 64, 32, 16)
    output_dim = 6
    dropout = 0.2  # eval-mode: identity

    key = jax.random.PRNGKey(0)
    key, kx = jax.random.split(key)
    x = jax.random.normal(kx, (batch, input_dim), jnp.float32)
    params = init_params(key, input_dim, layer_sizes, output_dim)

    # --- f32 path: exact semantics check against the pure-JAX reference ----
    slab_f32 = pack_params(params, compute_dtype=jnp.float32)
    out_f32 = jax.block_until_ready(
        mlp_forward(x, slab_f32, output_dim, compute_dtype=jnp.float32))
    ref_f32 = reference_forward(x, params, compute_dtype=jnp.float32)
    assert out_f32.shape == (batch, output_dim)
    assert jnp.allclose(out_f32, ref_f32, atol=1e-4, rtol=1e-4), \
        "f32 kernel mismatch vs reference"

    # --- bf16 path (default): full-rate MXU on v6e/v7x, f32 accumulation ----
    slab_bf16 = pack_params(params, compute_dtype=jnp.bfloat16)
    out_bf16 = jax.block_until_ready(
        mlp_forward(x, slab_bf16, output_dim, compute_dtype=jnp.bfloat16))
    ref_bf16 = reference_forward(x, params, compute_dtype=jnp.bfloat16)
    assert out_bf16.shape == (batch, output_dim)
    assert jnp.allclose(out_bf16, ref_bf16, atol=1e-2, rtol=1e-2), \
        "bf16 kernel mismatch vs bf16 reference"

    print("KERNEL_OK")
</pallas_src>

<mosaic_0001>
module attributes {stable_mosaic.version = 11 : i64} {
  func.func @_mlp_kernel(%arg0: i32, %arg1: memref<8x128xf32, #tpu.memory_space<vmem>>, %arg2: memref<128x768xf32, #tpu.memory_space<vmem>>, %arg3: memref<8x128xf32, #tpu.memory_space<vmem>>) attributes {dimension_semantics = [#tpu.dimension_semantics<parallel>], iteration_bounds = array<i64: 1>, scalar_prefetch = 0 : i64, scratch_operands = 0 : i64, tpu.core_type = #tpu.core_type<tc>, window_params = [{transform_indices = @transform_0, window_bounds = array<i64: 8, 128>}, {pipeline_mode = #tpu.pipeline_mode<synchronous>, transform_indices = @transform_1, window_bounds = array<i64: 128, 768>}, {transform_indices = @transform_2, window_bounds = array<i64: 8, 128>}]} {
    %c0 = arith.constant 0 : index
    %c0_0 = arith.constant 0 : index
    %0 = vector.load %arg1[%c0, %c0_0] : memref<8x128xf32, #tpu.memory_space<vmem>>, vector<8x128xf32>
    %c0_1 = arith.constant 0 : index
    %c0_2 = arith.constant 0 : index
    %1 = vector.load %arg2[%c0_1, %c0_2] : memref<128x768xf32, #tpu.memory_space<vmem>>, vector<128x128xf32>
    %cst = arith.constant dense<0.000000e+00> : vector<8x128xf32>
    %2 = tpu.matmul %0, %1, %cst {dimension_numbers = #tpu.dot_dimension_numbers<[1], [0], [0], [1], [0, 0, 1, 1], [], []>} : vector<8x128xf32>, vector<128x128xf32>, vector<8x128xf32> -> vector<8x128xf32>
    %cst_3 = arith.constant 0.000000e+00 : f32
    %3 = vector.broadcast %cst_3 : f32 to vector<8x128xf32>
    %4 = arith.maximumf %2, %3 : vector<8x128xf32>
    %c0_4 = arith.constant 0 : index
    %c128 = arith.constant 128 : index
    %5 = vector.load %arg2[%c0_4, %c128] : memref<128x768xf32, #tpu.memory_space<vmem>>, vector<128x128xf32>
    %cst_5 = arith.constant dense<0.000000e+00> : vector<8x128xf32>
    %6 = tpu.matmul %4, %5, %cst_5 {dimension_numbers = #tpu.dot_dimension_numbers<[1], [0], [0], [1], [0, 0, 1, 1], [], []>} : vector<8x128xf32>, vector<128x128xf32>, vector<8x128xf32> -> vector<8x128xf32>
    %cst_6 = arith.constant 0.000000e+00 : f32
    %7 = vector.broadcast %cst_6 : f32 to vector<8x128xf32>
    %8 = arith.maximumf %6, %7 : vector<8x128xf32>
    %c0_7 = arith.constant 0 : index
    %c256 = arith.constant 256 : index
    %9 = vector.load %arg2[%c0_7, %c256] : memref<128x768xf32, #tpu.memory_space<vmem>>, vector<128x128xf32>
    %cst_8 = arith.constant dense<0.000000e+00> : vector<8x128xf32>
    %10 = tpu.matmul %8, %9, %cst_8 {dimension_numbers = #tpu.dot_dimension_numbers<[1], [0], [0], [1], [0, 0, 1, 1], [], []>} : vector<8x128xf32>, vector<128x128xf32>, vector<8x128xf32> -> vector<8x128xf32>
    %cst_9 = arith.constant 0.000000e+00 : f32
    %11 = vector.broadcast %cst_9 : f32 to vector<8x128xf32>
    %12 = arith.maximumf %10, %11 : vector<8x128xf32>
    %c0_10 = arith.constant 0 : index
    %c384 = arith.constant 384 : index
    %13 = vector.load %arg2[%c0_10, %c384] : memref<128x768xf32, #tpu.memory_space<vmem>>, vector<128x128xf32>
    %cst_11 = arith.constant dense<0.000000e+00> : vector<8x128xf32>
    %14 = tpu.matmul %12, %13, %cst_11 {dimension_numbers = #tpu.dot_dimension_numbers<[1], [0], [0], [1], [0, 0, 1, 1], [], []>} : vector<8x128xf32>, vector<128x128xf32>, vector<8x128xf32> -> vector<8x128xf32>
    %cst_12 = arith.constant 0.000000e+00 : f32
    %15 = vector.broadcast %cst_12 : f32 to vector<8x128xf32>
    %16 = arith.maximumf %14, %15 : vector<8x128xf32>
    %c0_13 = arith.constant 0 : index
    %c512 = arith.constant 512 : index
    %17 = vector.load %arg2[%c0_13, %c512] : memref<128x768xf32, #tpu.memory_space<vmem>>, vector<128x128xf32>
    %cst_14 = arith.constant dense<0.000000e+00> : vector<8x128xf32>
    %18 = tpu.matmul %16, %17, %cst_14 {dimension_numbers = #tpu.dot_dimension_numbers<[1], [0], [0], [1], [0, 0, 1, 1], [], []>} : vector<8x128xf32>, vector<128x128xf32>, vector<8x128xf32> -> vector<8x128xf32>
    %cst_15 = arith.constant 0.000000e+00 : f32
    %19 = vector.broadcast %cst_15 : f32 to vector<8x128xf32>
    %20 = arith.maximumf %18, %19 : vector<8x128xf32>
    %c0_16 = arith.constant 0 : index
    %c640 = arith.constant 640 : index
    %21 = vector.load %arg2[%c0_16, %c640] : memref<128x768xf32, #tpu.memory_space<vmem>>, vector<128x128xf32>
    %cst_17 = arith.constant dense<0.000000e+00> : vector<8x128xf32>
    %22 = tpu.matmul %20, %21, %cst_17 {dimension_numbers = #tpu.dot_dimension_numbers<[1], [0], [0], [1], [0, 0, 1, 1], [], []>} : vector<8x128xf32>, vector<128x128xf32>, vector<8x128xf32> -> vector<8x128xf32>
    %c0_18 = arith.constant 0 : index
    %c0_19 = arith.constant 0 : index
    %23 = vector.load %arg3[%c0_18, %c0_19] : memref<8x128xf32, #tpu.memory_space<vmem>>, vector<8x128xf32>
    tpu.vector_store %arg3[%c0_18, %c0_19], %22 {strides = array<i32>} : memref<8x128xf32, #tpu.memory_space<vmem>>, vector<8x128xf32>,
    return
  }
  func.func @transform_0(%arg0: i32) -> (i32, i32) {
    %c0_i32 = arith.constant 0 : i32
    %c0_i32_0 = arith.constant 0 : i32
    return %arg0, %c0_i32 : i32, i32
  }
  func.func @transform_1(%arg0: i32) -> (i32, i32) {
    %c0_i32 = arith.constant 0 : i32
    %c0_i32_0 = arith.constant 0 : i32
    %c0_i32_1 = arith.constant 0 : i32
    return %c0_i32, %c0_i32_0 : i32, i32
  }
  func.func @transform_2(%arg0: i32) -> (i32, i32) {
    %c0_i32 = arith.constant 0 : i32
    %c0_i32_0 = arith.constant 0 : i32
    return %arg0, %c0_i32 : i32, i32
  }
}

</mosaic_0001>

<llo_original>
// kernel: tpu_custom_call.1
$region0: #{tpu_custom_call.1}
  #allocation0 [shape = 'u32[]', space=smem, size = 0x4, offset = 0x4, fixed_abs, tag = 'smem constant byte address 0x4 - core index']
  #allocation1 [shape = 'u32[144,128]{1,0:T(1,128)}', space=vmem, size = 0x12000, scoped, tag = 'internal scratch']
  %s0 = inlined_call_operand.hbm [shape: f32[8,128], index: 0, kind: input, shape index: {}]
  %s1 = inlined_call_operand.hbm [shape: f32[128,768], index: 1, kind: input, shape index: {}]
  %s2 = inlined_call_operand.hbm [shape: f32[8,128], index: 2, kind: output, shape index: {}]
  %s3 = sld [smem:[#allocation0]]
  $region26: #{tpu_custom_call.1} parent=0
    _
  %s5 = ssub.s32 1, %s3
  %s6 = scalar_select 0, %s5, %s3
  $region1: #{tpu_custom_call.1} parent=0
    #allocation2 [shape = 'u8[4096]{0}', space=vmem, size = 0x1000, scoped, tag = 'input window, operand 0, single buffered']
    #allocation3 [shape = 's32[1]{0}', space=sflag, size = 0x4, scoped, tag = 'scoped memory for tpu_custom_call.1']
    #allocation4 [shape = 's32[1]{0}', space=sflag, size = 0x4, scoped, tag = 'scoped memory for tpu_custom_call.1']
    #allocation5 [shape = 'u8[393216]{0}', space=vmem, size = 0x60000, scoped, tag = 'input window, operand 1, single buffered']
    #allocation6 [shape = 's32[1]{0}', space=sflag, size = 0x4, scoped, tag = 'scoped memory for tpu_custom_call.1']
    #allocation7 [shape = 'u8[4096]{0}', space=vmem, size = 0x1000, scoped, tag = 'output window, operand 0, single buffered']
    %7 = vsyncpa [#allocation3], 0
    %8 = vsyncpa [#allocation6], 0
    %9 = vsyncpa [#allocation4], 0
    // Predicated region
    $region2: #{tpu_custom_call.1} parent=1 // pred_check
      _
    $region3: #{tpu_custom_call.1} parent=1 // pred_check_branch
      %11 = sbr.rel (0) target = $region5
    $region4: #{tpu_custom_call.1} parent=1 // pred_region
      %s13 = ssub.s32 128, 128
      %14 = vsyncadd [#allocation3], %s13
      %s16 = sshll.u32 [#allocation2], 4
      %s17 = int_to_ptr.vmem [resolvable:$true] %s16
      %19 = dma.hbm_to_vmem [thread:$0]  %s0, 128, %s17, [#allocation3]
    $region5: #{tpu_custom_call.1} parent=1 // pred_fallthru
      _
    // Predicated region
    $region6: #{tpu_custom_call.1} parent=1 // pred_check
      _
    $region7: #{tpu_custom_call.1} parent=1 // pred_check_branch
      %21 = sbr.rel (0) target = $region9
    $region8: #{tpu_custom_call.1} parent=1 // pred_region
      %s23 = ssub.s32 12288, 12288
      %24 = vsyncadd [#allocation6], %s23
      %s25 = sshll.u32 [#allocation5], 4
      %s26 = int_to_ptr.vmem [resolvable:$true] %s25
      %31 = dma.hbm_to_vmem [thread:$0]  %s1, 12288, %s26, [#allocation6], 768, 768, 48
    $region9: #{tpu_custom_call.1} parent=1 // pred_fallthru
      _
    // Predicated region
    $region10: #{tpu_custom_call.1} parent=1 // pred_check
      _
    $region11: #{tpu_custom_call.1} parent=1 // pred_check_branch
      %33 = sbr.rel (0) target = $region13
    $region12: #{tpu_custom_call.1} parent=1 // pred_region
      %34 = dma.done [#allocation3], 128
    $region13: #{tpu_custom_call.1} parent=1 // pred_fallthru
      _
    // Predicated region
    $region14: #{tpu_custom_call.1} parent=1 // pred_check
      _
    $region15: #{tpu_custom_call.1} parent=1 // pred_check_branch
      %36 = sbr.rel (0) target = $region17
    $region16: #{tpu_custom_call.1} parent=1 // pred_region
      %37 = dma.done [#allocation6], 12288
    $region17: #{tpu_custom_call.1} parent=1 // pred_fallthru
      _
    %v38 = vld [vmem:[#allocation2] sm:$0xff]
    %v39 = vld [vmem:[#allocation5] sm:$0xff]
    %v40 = vld [vmem:[#allocation5 + $0x30] sm:$0xff]
    %v41 = vld [vmem:[#allocation5 + $0x60] sm:$0xff]
    %v42 = vld [vmem:[#allocation5 + $0x90] sm:$0xff]
    %v43 = vld [vmem:[#allocation5 + $0xc0] sm:$0xff]
    %v44 = vld [vmem:[#allocation5 + $0xf0] sm:$0xff]
    %v45 = vld [vmem:[#allocation5 + $0x120] sm:$0xff]
    %v46 = vld [vmem:[#allocation5 + $0x150] sm:$0xff]
    %v47 = vld [vmem:[#allocation5 + $0x180] sm:$0xff]
    %v48 = vld [vmem:[#allocation5 + $0x1b0] sm:$0xff]
    %v49 = vld [vmem:[#allocation5 + $0x1e0] sm:$0xff]
    %v50 = vld [vmem:[#allocation5 + $0x210] sm:$0xff]
    %v51 = vld [vmem:[#allocation5 + $0x240] sm:$0xff]
    %v52 = vld [vmem:[#allocation5 + $0x270] sm:$0xff]
    %v53 = vld [vmem:[#allocation5 + $0x2a0] sm:$0xff]
    %v54 = vld [vmem:[#allocation5 + $0x2d0] sm:$0xff]
    %55 = vmatprep.subr.mxu0 0.0
    %56 = vmatpush1.msra.mxu0 %v39
    %57 = vmatprep.subr.mxu0 0.0
    %58 = vmatpush1.msra.mxu0 %v40
    %59 = vmatprep.subr.mxu0 0.0
    %60 = vmatpush1.msra.mxu0 %v41
    %61 = vmatprep.subr.mxu0 0.0
    %62 = vmatpush1.msra.mxu0 %v42
    %63 = vmatprep.subr.mxu0 0.0
    %64 = vmatpush1.msra.mxu0 %v43
    %65 = vmatprep.subr.mxu0 0.0
    %66 = vmatpush1.msra.mxu0 %v44
    %67 = vmatprep.subr.mxu0 0.0
    %68 = vmatpush1.msra.mxu0 %v45
    %69 = vmatprep.subr.mxu0 0.0
    %70 = vmatpush1.msra.mxu0 %v46
    %71 = vmatprep.subr.mxu0 0.0
    %72 = vmatpush1.msra.mxu0 %v47
    %73 = vmatprep.subr.mxu0 0.0
    %74 = vmatpush1.msra.mxu0 %v48
    %75 = vmatprep.subr.mxu0 0.0
    %76 = vmatpush1.msra.mxu0 %v49
    %77 = vmatprep.subr.mxu0 0.0
    %78 = vmatpush1.msra.mxu0 %v50
    %79 = vmatprep.subr.mxu0 0.0
    %80 = vmatpush1.msra.mxu0 %v51
    %81 = vmatprep.subr.mxu0 0.0
    %82 = vmatpush1.msra.mxu0 %v52
    %83 = vmatprep.subr.mxu0 0.0
    %84 = vmatpush1.msra.mxu0 %v53
    %85 = vmatprep.subr.mxu0 0.0
    %86 = vmatpush1.msra.mxu0 %v54
    %87 = vmatprep.subr.mxu0 0.0
    %88 = vmatpush1.msra.mxu0 0.0
    %89 = vmatprep.subr.mxu0 0.0
    %90 = vmatpush1.msra.mxu0 0.0
    %91 = vmatprep.subr.mxu0 0.0
    %92 = vmatpush1.msra.mxu0 0.0
    %93 = vmatprep.subr.mxu0 0.0
    %94 = vmatpush1.msra.mxu0 0.0
    %95 = vmatprep.subr.mxu0 0.0
    %96 = vmatpush1.msra.mxu0 0.0
    %97 = vmatprep.subr.mxu0 0.0
    %98 = vmatpush1.msra.mxu0 0.0
    %99 = vmatprep.subr.mxu0 0.0
    %100 = vmatpush1.msra.mxu0 0.0
    %101 = vmatprep.subr.mxu0 0.0
    %102 = vmatpush1.msra.mxu0 0.0
    %103 = vmatprep.subr.mxu0 0.0
    %104 = vmatpush1.msra.mxu0 0.0
    %105 = vmatprep.subr.mxu0 0.0
    %106 = vmatpush1.msra.mxu0 0.0
    %107 = vmatprep.subr.mxu0 0.0
    %108 = vmatpush1.msra.mxu0 0.0
    %109 = vmatprep.subr.mxu0 0.0
    %110 = vmatpush1.msra.mxu0 0.0
    %111 = vmatprep.subr.mxu0 0.0
    %112 = vmatpush1.msra.mxu0 0.0
    %113 = vmatprep.subr.mxu0 0.0
    %114 = vmatpush1.msra.mxu0 0.0
    %115 = vmatprep.subr.mxu0 0.0
    %116 = vmatpush1.msra.mxu0 0.0
    %117 = vmatprep.subr.mxu0 0.0
    %118 = vmatpush1.msra.mxu0 0.0
    %119 = vmatprep.mubr.f32.mxu0 0.0
    %120 = vmatmul.mubr.f32.gmra.mrb[0].mxu0 %v38
    %v121 = vpop.f32.mrb[0].mxu0
    %v122 = vadd.f32 0.0, %v121
    %v123 = vpop.f32.mrb[0].mxu0
    %124 = vdwg.mxu0
    %v125 = vmax.f32 %v122, 0.0
    %v126 = vld [vmem:[#allocation5 + $0x8] sm:$0xff]
    %v127 = vld [vmem:[#allocation5 + $0x38] sm:$0xff]
    %v128 = vld [vmem:[#allocation5 + $0x68] sm:$0xff]
    %v129 = vld [vmem:[#allocation5 + $0x98] sm:$0xff]
    %v130 = vld [vmem:[#allocation5 + $0xc8] sm:$0xff]
    %v131 = vld [vmem:[#allocation5 + $0xf8] sm:$0xff]
    %v132 = vld [vmem:[#allocation5 + $0x128] sm:$0xff]
    %v133 = vld [vmem:[#allocation5 + $0x158] sm:$0xff]
    %v134 = vld [vmem:[#allocation5 + $0x188] sm:$0xff]
    %v135 = vld [vmem:[#allocation5 + $0x1b8] sm:$0xff]
    %v136 = vld [vmem:[#allocation5 + $0x1e8] sm:$0xff]
    %v137 = vld [vmem:[#allocation5 + $0x218] sm:$0xff]
    %v138 = vld [vmem:[#allocation5 + $0x248] sm:$0xff]
    %v139 = vld [vmem:[#allocation5 + $0x278] sm:$0xff]
    %v140 = vld [vmem:[#allocation5 + $0x2a8] sm:$0xff]
    %v141 = vld [vmem:[#allocation5 + $0x2d8] sm:$0xff]
    %142 = vmatprep.subr.mxu0 0.0
    %143 = vmatpush1.msra.mxu0 %v126
    %144 = vmatprep.subr.mxu0 0.0
    %145 = vmatpush1.msra.mxu0 %v127
    %146 = vmatprep.subr.mxu0 0.0
    %147 = vmatpush1.msra.mxu0 %v128
    %148 = vmatprep.subr.mxu0 0.0
    %149 = vmatpush1.msra.mxu0 %v129
    %150 = vmatprep.subr.mxu0 0.0
    %151 = vmatpush1.msra.mxu0 %v130
    %152 = vmatprep.subr.mxu0 0.0
    %153 = vmatpush1.msra.mxu0 %v131
    %154 = vmatprep.subr.mxu0 0.0
    %155 = vmatpush1.msra.mxu0 %v132
    %156 = vmatprep.subr.mxu0 0.0
    %157 = vmatpush1.msra.mxu0 %v133
    %158 = vmatprep.subr.mxu0 0.0
    %159 = vmatpush1.msra.mxu0 %v134
    %160 = vmatprep.subr.mxu0 0.0
    %161 = vmatpush1.msra.mxu0 %v135
    %162 = vmatprep.subr.mxu0 0.0
    %163 = vmatpush1.msra.mxu0 %v136
    %164 = vmatprep.subr.mxu0 0.0
    %165 = vmatpush1.msra.mxu0 %v137
    %166 = vmatprep.subr.mxu0 0.0
    %167 = vmatpush1.msra.mxu0 %v138
    %168 = vmatprep.subr.mxu0 0.0
    %169 = vmatpush1.msra.mxu0 %v139
    %170 = vmatprep.subr.mxu0 0.0
    %171 = vmatpush1.msra.mxu0 %v140
    %172 = vmatprep.subr.mxu0 0.0
    %173 = vmatpush1.msra.mxu0 %v141
    %174 = vmatprep.subr.mxu0 0.0
    %175 = vmatpush1.msra.mxu0 0.0
    %176 = vmatprep.subr.mxu0 0.0
    %177 = vmatpush1.msra.mxu0 0.0
    %178 = vmatprep.subr.mxu0 0.0
    %179 = vmatpush1.msra.mxu0 0.0
    %180 = vmatprep.subr.mxu0 0.0
    %181 = vmatpush1.msra.mxu0 0.0
    %182 = vmatprep.subr.mxu0 0.0
    %183 = vmatpush1.msra.mxu0 0.0
    %184 = vmatprep.subr.mxu0 0.0
    %185 = vmatpush1.msra.mxu0 0.0
    %186 = vmatprep.subr.mxu0 0.0
    %187 = vmatpush1.msra.mxu0 0.0
    %188 = vmatprep.subr.mxu0 0.0
    %189 = vmatpush1.msra.mxu0 0.0
    %190 = vmatprep.subr.mxu0 0.0
    %191 = vmatpush1.msra.mxu0 0.0
    %192 = vmatprep.subr.mxu0 0.0
    %193 = vmatpush1.msra.mxu0 0.0
    %194 = vmatprep.subr.mxu0 0.0
    %195 = vmatpush1.msra.mxu0 0.0
    %196 = vmatprep.subr.mxu0 0.0
    %197 = vmatpush1.msra.mxu0 0.0
    %198 = vmatprep.subr.mxu0 0.0
    %199 = vmatpush1.msra.mxu0 0.0
    %200 = vmatprep.subr.mxu0 0.0
    %201 = vmatpush1.msra.mxu0 0.0
    %202 = vmatprep.subr.mxu0 0.0
    %203 = vmatpush1.msra.mxu0 0.0
    %204 = vmatprep.subr.mxu0 0.0
    %205 = vmatpush1.msra.mxu0 0.0
    %206 = vmatprep.mubr.f32.mxu0 0.0
    %207 = vmatmul.mubr.f32.gmra.mrb[0].mxu0 %v125
    %v208 = vpop.f32.mrb[0].mxu0
    %v209 = vadd.f32 0.0, %v208
    %v210 = vpop.f32.mrb[0].mxu0
    %211 = vdwg.mxu0
    %v212 = vmax.f32 %v209, 0.0
    %v213 = vld [vmem:[#allocation5 + $0x10] sm:$0xff]
    %v214 = vld [vmem:[#allocation5 + $0x40] sm:$0xff]
    %v215 = vld [vmem:[#allocation5 + $0x70] sm:$0xff]
    %v216 = vld [vmem:[#allocation5 + $0xa0] sm:$0xff]
    %v217 = vld [vmem:[#allocation5 + $0xd0] sm:$0xff]
    %v218 = vld [vmem:[#allocation5 + $0x100] sm:$0xff]
    %v219 = vld [vmem:[#allocation5 + $0x130] sm:$0xff]
    %v220 = vld [vmem:[#allocation5 + $0x160] sm:$0xff]
    %v221 = vld [vmem:[#allocation5 + $0x190] sm:$0xff]
    %v222 = vld [vmem:[#allocation5 + $0x1c0] sm:$0xff]
    %v223 = vld [vmem:[#allocation5 + $0x1f0] sm:$0xff]
    %v224 = vld [vmem:[#allocation5 + $0x220] sm:$0xff]
    %v225 = vld [vmem:[#allocation5 + $0x250] sm:$0xff]
    %v226 = vld [vmem:[#allocation5 + $0x280] sm:$0xff]
    %v227 = vld [vmem:[#allocation5 + $0x2b0] sm:$0xff]
    %v228 = vld [vmem:[#allocation5 + $0x2e0] sm:$0xff]
    %229 = vmatprep.subr.mxu0 0.0
    %230 = vmatpush1.msra.mxu0 %v213
    %231 = vmatprep.subr.mxu0 0.0
    %232 = vmatpush1.msra.mxu0 %v214
    %233 = vmatprep.subr.mxu0 0.0
    %234 = vmatpush1.msra.mxu0 %v215
    %235 = vmatprep.subr.mxu0 0.0
    %236 = vmatpush1.msra.mxu0 %v216
    %237 = vmatprep.subr.mxu0 0.0
    %238 = vmatpush1.msra.mxu0 %v217
    %239 = vmatprep.subr.mxu0 0.0
    %240 = vmatpush1.msra.mxu0 %v218
    %241 = vmatprep.subr.mxu0 0.0
    %242 = vmatpush1.msra.mxu0 %v219
    %243 = vmatprep.subr.mxu0 0.0
    %244 = vmatpush1.msra.mxu0 %v220
    %245 = vmatprep.subr.mxu0 0.0
    %246 = vmatpush1.msra.mxu0 %v221
    %247 = vmatprep.subr.mxu0 0.0
    %248 = vmatpush1.msra.mxu0 %v222
    %249 = vmatprep.subr.mxu0 0.0
    %250 = vmatpush1.msra.mxu0 %v223
    %251 = vmatprep.subr.mxu0 0.0
    %252 = vmatpush1.msra.mxu0 %v224
    %253 = vmatprep.subr.mxu0 0.0
    %254 = vmatpush1.msra.mxu0 %v225
    %255 = vmatprep.subr.mxu0 0.0
    %256 = vmatpush1.msra.mxu0 %v226
    %257 = vmatprep.subr.mxu0 0.0
    %258 = vmatpush1.msra.mxu0 %v227
    %259 = vmatprep.subr.mxu0 0.0
    %260 = vmatpush1.msra.mxu0 %v228
    %261 = vmatprep.subr.mxu0 0.0
    %262 = vmatpush1.msra.mxu0 0.0
    %263 = vmatprep.subr.mxu0 0.0
    %264 = vmatpush1.msra.mxu0 0.0
    %265 = vmatprep.subr.mxu0 0.0
    %266 = vmatpush1.msra.mxu0 0.0
    %267 = vmatprep.subr.mxu0 0.0
    %268 = vmatpush1.msra.mxu0 0.0
    %269 = vmatprep.subr.mxu0 0.0
    %270 = vmatpush1.msra.mxu0 0.0
    %271 = vmatprep.subr.mxu0 0.0
    %272 = vmatpush1.msra.mxu0 0.0
    %273 = vmatprep.subr.mxu0 0.0
    %274 = vmatpush1.msra.mxu0 0.0
    %275 = vmatprep.subr.mxu0 0.0
    %276 = vmatpush1.msra.mxu0 0.0
    %277 = vmatprep.subr.mxu0 0.0
    %278 = vmatpush1.msra.mxu0 0.0
    %279 = vmatprep.subr.mxu0 0.0
    %280 = vmatpush1.msra.mxu0 0.0
    %281 = vmatprep.subr.mxu0 0.0
    %282 = vmatpush1.msra.mxu0 0.0
    %283 = vmatprep.subr.mxu0 0.0
    %284 = vmatpush1.msra.mxu0 0.0
    %285 = vmatprep.subr.mxu0 0.0
    %286 = vmatpush1.msra.mxu0 0.0
    %287 = vmatprep.subr.mxu0 0.0
    %288 = vmatpush1.msra.mxu0 0.0
    %289 = vmatprep.subr.mxu0 0.0
    %290 = vmatpush1.msra.mxu0 0.0
    %291 = vmatprep.subr.mxu0 0.0
    %292 = vmatpush1.msra.mxu0 0.0
    %293 = vmatprep.mubr.f32.mxu0 0.0
    %294 = vmatmul.mubr.f32.gmra.mrb[0].mxu0 %v212
    %v295 = vpop.f32.mrb[0].mxu0
    %v296 = vadd.f32 0.0, %v295
    %v297 = vpop.f32.mrb[0].mxu0
    %298 = vdwg.mxu0
    %v299 = vmax.f32 %v296, 0.0
    %v300 = vld [vmem:[#allocation5 + $0x18] sm:$0xff]
    %v301 = vld [vmem:[#allocation5 + $0x48] sm:$0xff]
    %v302 = vld [vmem:[#allocation5 + $0x78] sm:$0xff]
    %v303 = vld [vmem:[#allocation5 + $0xa8] sm:$0xff]
    %v304 = vld [vmem:[#allocation5 + $0xd8] sm:$0xff]
    %v305 = vld [vmem:[#allocation5 + $0x108] sm:$0xff]
    %v306 = vld [vmem:[#allocation5 + $0x138] sm:$0xff]
    %v307 = vld [vmem:[#allocation5 + $0x168] sm:$0xff]
    %v308 = vld [vmem:[#allocation5 + $0x198] sm:$0xff]
    %v309 = vld [vmem:[#allocation5 + $0x1c8] sm:$0xff]
    %v310 = vld [vmem:[#allocation5 + $0x1f8] sm:$0xff]
    %v311 = vld [vmem:[#allocation5 + $0x228] sm:$0xff]
    %v312 = vld [vmem:[#allocation5 + $0x258] sm:$0xff]
    %v313 = vld [vmem:[#allocation5 + $0x288] sm:$0xff]
    %v314 = vld [vmem:[#allocation5 + $0x2b8] sm:$0xff]
    %v315 = vld [vmem:[#allocation5 + $0x2e8] sm:$0xff]
    %316 = vmatprep.subr.mxu0 0.0
    %317 = vmatpush1.msra.mxu0 %v300
    %318 = vmatprep.subr.mxu0 0.0
    %319 = vmatpush1.msra.mxu0 %v301
    %320 = vmatprep.subr.mxu0 0.0
    %321 = vmatpush1.msra.mxu0 %v302
    %322 = vmatprep.subr.mxu0 0.0
    %323 = vmatpush1.msra.mxu0 %v303
    %324 = vmatprep.subr.mxu0 0.0
    %325 = vmatpush1.msra.mxu0 %v304
    %326 = vmatprep.subr.mxu0 0.0
    %327 = vmatpush1.msra.mxu0 %v305
    %328 = vmatprep.subr.mxu0 0.0
    %329 = vmatpush1.msra.mxu0 %v306
    %330 = vmatprep.subr.mxu0 0.0
    %331 = vmatpush1.msra.mxu0 %v307
    %332 = vmatprep.subr.mxu0 0.0
    %333 = vmatpush1.msra.mxu0 %v308
    %334 = vmatprep.subr.mxu0 0.0
    %335 = vmatpush1.msra.mxu0 %v309
    %336 = vmatprep.subr.mxu0 0.0
    %337 = vmatpush1.msra.mxu0 %v310
    %338 = vmatprep.subr.mxu0 0.0
    %339 = vmatpush1.msra.mxu0 %v311
    %340 = vmatprep.subr.mxu0 0.0
    %341 = vmatpush1.msra.mxu0 %v312
    %342 = vmatprep.subr.mxu0 0.0
    %343 = vmatpush1.msra.mxu0 %v313
    %344 = vmatprep.subr.mxu0 0.0
    %345 = vmatpush1.msra.mxu0 %v314
    %346 = vmatprep.subr.mxu0 0.0
    %347 = vmatpush1.msra.mxu0 %v315
    %348 = vmatprep.subr.mxu0 0.0
    %349 = vmatpush1.msra.mxu0 0.0
    %350 = vmatprep.subr.mxu0 0.0
    %351 = vmatpush1.msra.mxu0 0.0
    %352 = vmatprep.subr.mxu0 0.0
    %353 = vmatpush1.msra.mxu0 0.0
    %354 = vmatprep.subr.mxu0 0.0
    %355 = vmatpush1.msra.mxu0 0.0
    %356 = vmatprep.subr.mxu0 0.0
    %357 = vmatpush1.msra.mxu0 0.0
    %358 = vmatprep.subr.mxu0 0.0
    %359 = vmatpush1.msra.mxu0 0.0
    %360 = vmatprep.subr.mxu0 0.0
    %361 = vmatpush1.msra.mxu0 0.0
    %362 = vmatprep.subr.mxu0 0.0
    %363 = vmatpush1.msra.mxu0 0.0
    %364 = vmatprep.subr.mxu0 0.0
    %365 = vmatpush1.msra.mxu0 0.0
    %366 = vmatprep.subr.mxu0 0.0
    %367 = vmatpush1.msra.mxu0 0.0
    %368 = vmatprep.subr.mxu0 0.0
    %369 = vmatpush1.msra.mxu0 0.0
    %370 = vmatprep.subr.mxu0 0.0
    %371 = vmatpush1.msra.mxu0 0.0
    %372 = vmatprep.subr.mxu0 0.0
    %373 = vmatpush1.msra.mxu0 0.0
    %374 = vmatprep.subr.mxu0 0.0
    %375 = vmatpush1.msra.mxu0 0.0
    %376 = vmatprep.subr.mxu0 0.0
    %377 = vmatpush1.msra.mxu0 0.0
    %378 = vmatprep.subr.mxu0 0.0
    %379 = vmatpush1.msra.mxu0 0.0
    %380 = vmatprep.mubr.f32.mxu0 0.0
    %381 = vmatmul.mubr.f32.gmra.mrb[0].mxu0 %v299
    %v382 = vpop.f32.mrb[0].mxu0
    %v383 = vadd.f32 0.0, %v382
    %v384 = vpop.f32.mrb[0].mxu0
    %385 = vdwg.mxu0
    %v386 = vmax.f32 %v383, 0.0
    %v387 = vld [vmem:[#allocation5 + $0x20] sm:$0xff]
    %v388 = vld [vmem:[#allocation5 + $0x50] sm:$0xff]
    %v389 = vld [vmem:[#allocation5 + $0x80] sm:$0xff]
    %v390 = vld [vmem:[#allocation5 + $0xb0] sm:$0xff]
    %v391 = vld [vmem:[#allocation5 + $0xe0] sm:$0xff]
    %v392 = vld [vmem:[#allocation5 + $0x110] sm:$0xff]
    %v393 = vld [vmem:[#allocation5 + $0x140] sm:$0xff]
    %v394 = vld [vmem:[#allocation5 + $0x170] sm:$0xff]
    %v395 = vld [vmem:[#allocation5 + $0x1a0] sm:$0xff]
    %v396 = vld [vmem:[#allocation5 + $0x1d0] sm:$0xff]
    %v397 = vld [vmem:[#allocation5 + $0x200] sm:$0xff]
    %v398 = vld [vmem:[#allocation5 + $0x230] sm:$0xff]
    %v399 = vld [vmem:[#allocation5 + $0x260] sm:$0xff]
    %v400 = vld [vmem:[#allocation5 + $0x290] sm:$0xff]
    %v401 = vld [vmem:[#allocation5 + $0x2c0] sm:$0xff]
    %v402 = vld [vmem:[#allocation5 + $0x2f0] sm:$0xff]
    %403 = vmatprep.subr.mxu0 0.0
    %404 = vmatpush1.msra.mxu0 %v387
    %405 = vmatprep.subr.mxu0 0.0
    %406 = vmatpush1.msra.mxu0 %v388
    %407 = vmatprep.subr.mxu0 0.0
    %408 = vmatpush1.msra.mxu0 %v389
    %409 = vmatprep.subr.mxu0 0.0
    %410 = vmatpush1.msra.mxu0 %v390
    %411 = vmatprep.subr.mxu0 0.0
    %412 = vmatpush1.msra.mxu0 %v391
    %413 = vmatprep.subr.mxu0 0.0
    %414 = vmatpush1.msra.mxu0 %v392
    %415 = vmatprep.subr.mxu0 0.0
    %416 = vmatpush1.msra.mxu0 %v393
    %417 = vmatprep.subr.mxu0 0.0
    %418 = vmatpush1.msra.mxu0 %v394
    %419 = vmatprep.subr.mxu0 0.0
    %420 = vmatpush1.msra.mxu0 %v395
    %421 = vmatprep.subr.mxu0 0.0
    %422 = vmatpush1.msra.mxu0 %v396
    %423 = vmatprep.subr.mxu0 0.0
    %424 = vmatpush1.msra.mxu0 %v397
    %425 = vmatprep.subr.mxu0 0.0
    %426 = vmatpush1.msra.mxu0 %v398
    %427 = vmatprep.subr.mxu0 0.0
    %428 = vmatpush1.msra.mxu0 %v399
    %429 = vmatprep.subr.mxu0 0.0
    %430 = vmatpush1.msra.mxu0 %v400
    %431 = vmatprep.subr.mxu0 0.0
    %432 = vmatpush1.msra.mxu0 %v401
    %433 = vmatprep.subr.mxu0 0.0
    %434 = vmatpush1.msra.mxu0 %v402
    %435 = vmatprep.subr.mxu0 0.0
    %436 = vmatpush1.msra.mxu0 0.0
    %437 = vmatprep.subr.mxu0 0.0
    %438 = vmatpush1.msra.mxu0 0.0
    %439 = vmatprep.subr.mxu0 0.0
    %440 = vmatpush1.msra.mxu0 0.0
    %441 = vmatprep.subr.mxu0 0.0
    %442 = vmatpush1.msra.mxu0 0.0
    %443 = vmatprep.subr.mxu0 0.0
    %444 = vmatpush1.msra.mxu0 0.0
    %445 = vmatprep.subr.mxu0 0.0
    %446 = vmatpush1.msra.mxu0 0.0
    %447 = vmatprep.subr.mxu0 0.0
    %448 = vmatpush1.msra.mxu0 0.0
    %449 = vmatprep.subr.mxu0 0.0
    %450 = vmatpush1.msra.mxu0 0.0
    %451 = vmatprep.subr.mxu0 0.0
    %452 = vmatpush1.msra.mxu0 0.0
    %453 = vmatprep.subr.mxu0 0.0
    %454 = vmatpush1.msra.mxu0 0.0
    %455 = vmatprep.subr.mxu0 0.0
    %456 = vmatpush1.msra.mxu0 0.0
    %457 = vmatprep.subr.mxu0 0.0
    %458 = vmatpush1.msra.mxu0 0.0
    %459 = vmatprep.subr.mxu0 0.0
    %460 = vmatpush1.msra.mxu0 0.0
    %461 = vmatprep.subr.mxu0 0.0
    %462 = vmatpush1.msra.mxu0 0.0
    %463 = vmatprep.subr.mxu0 0.0
    %464 = vmatpush1.msra.mxu0 0.0
    %465 = vmatprep.subr.mxu0 0.0
    %466 = vmatpush1.msra.mxu0 0.0
    %467 = vmatprep.mubr.f32.mxu0 0.0
    %468 = vmatmul.mubr.f32.gmra.mrb[0].mxu0 %v386
    %v469 = vpop.f32.mrb[0].mxu0
    %v470 = vadd.f32 0.0, %v469
    %v471 = vpop.f32.mrb[0].mxu0
    %472 = vdwg.mxu0
    %v473 = vmax.f32 %v470, 0.0
    %v474 = vld [vmem:[#allocation5 + $0x28] sm:$0xff]
    %v475 = vld [vmem:[#allocation5 + $0x58] sm:$0xff]
    %v476 = vld [vmem:[#allocation5 + $0x88] sm:$0xff]
    %v477 = vld [vmem:[#allocation5 + $0xb8] sm:$0xff]
    %v478 = vld [vmem:[#allocation5 + $0xe8] sm:$0xff]
    %v479 = vld [vmem:[#allocation5 + $0x118] sm:$0xff]
    %v480 = vld [vmem:[#allocation5 + $0x148] sm:$0xff]
    %v481 = vld [vmem:[#allocation5 + $0x178] sm:$0xff]
    %v482 = vld [vmem:[#allocation5 + $0x1a8] sm:$0xff]
    %v483 = vld [vmem:[#allocation5 + $0x1d8] sm:$0xff]
    %v484 = vld [vmem:[#allocation5 + $0x208] sm:$0xff]
    %v485 = vld [vmem:[#allocation5 + $0x238] sm:$0xff]
    %v486 = vld [vmem:[#allocation5 + $0x268] sm:$0xff]
    %v487 = vld [vmem:[#allocation5 + $0x298] sm:$0xff]
    %v488 = vld [vmem:[#allocation5 + $0x2c8] sm:$0xff]
    %v489 = vld [vmem:[#allocation5 + $0x2f8] sm:$0xff]
    %490 = vmatprep.subr.mxu0 0.0
    %491 = vmatpush1.msra.mxu0 %v474
    %492 = vmatprep.subr.mxu0 0.0
    %493 = vmatpush1.msra.mxu0 %v475
    %494 = vmatprep.subr.mxu0 0.0
    %495 = vmatpush1.msra.mxu0 %v476
    %496 = vmatprep.subr.mxu0 0.0
    %497 = vmatpush1.msra.mxu0 %v477
    %498 = vmatprep.subr.mxu0 0.0
    %499 = vmatpush1.msra.mxu0 %v478
    %500 = vmatprep.subr.mxu0 0.0
    %501 = vmatpush1.msra.mxu0 %v479
    %502 = vmatprep.subr.mxu0 0.0
    %503 = vmatpush1.msra.mxu0 %v480
    %504 = vmatprep.subr.mxu0 0.0
    %505 = vmatpush1.msra.mxu0 %v481
    %506 = vmatprep.subr.mxu0 0.0
    %507 = vmatpush1.msra.mxu0 %v482
    %508 = vmatprep.subr.mxu0 0.0
    %509 = vmatpush1.msra.mxu0 %v483
    %510 = vmatprep.subr.mxu0 0.0
    %511 = vmatpush1.msra.mxu0 %v484
    %512 = vmatprep.subr.mxu0 0.0
    %513 = vmatpush1.msra.mxu0 %v485
    %514 = vmatprep.subr.mxu0 0.0
    %515 = vmatpush1.msra.mxu0 %v486
    %516 = vmatprep.subr.mxu0 0.0
    %517 = vmatpush1.msra.mxu0 %v487
    %518 = vmatprep.subr.mxu0 0.0
    %519 = vmatpush1.msra.mxu0 %v488
    %520 = vmatprep.subr.mxu0 0.0
    %521 = vmatpush1.msra.mxu0 %v489
    %522 = vmatprep.subr.mxu0 0.0
    %523 = vmatpush1.msra.mxu0 0.0
    %524 = vmatprep.subr.mxu0 0.0
    %525 = vmatpush1.msra.mxu0 0.0
    %526 = vmatprep.subr.mxu0 0.0
    %527 = vmatpush1.msra.mxu0 0.0
    %528 = vmatprep.subr.mxu0 0.0
    %529 = vmatpush1.msra.mxu0 0.0
    %530 = vmatprep.subr.mxu0 0.0
    %531 = vmatpush1.msra.mxu0 0.0
    %532 = vmatprep.subr.mxu0 0.0
    %533 = vmatpush1.msra.mxu0 0.0
    %534 = vmatprep.subr.mxu0 0.0
    %535 = vmatpush1.msra.mxu0 0.0
    %536 = vmatprep.subr.mxu0 0.0
    %537 = vmatpush1.msra.mxu0 0.0
    %538 = vmatprep.subr.mxu0 0.0
    %539 = vmatpush1.msra.mxu0 0.0
    %540 = vmatprep.subr.mxu0 0.0
    %541 = vmatpush1.msra.mxu0 0.0
    %542 = vmatprep.subr.mxu0 0.0
    %543 = vmatpush1.msra.mxu0 0.0
    %544 = vmatprep.subr.mxu0 0.0
    %545 = vmatpush1.msra.mxu0 0.0
    %546 = vmatprep.subr.mxu0 0.0
    %547 = vmatpush1.msra.mxu0 0.0
    %548 = vmatprep.subr.mxu0 0.0
    %549 = vmatpush1.msra.mxu0 0.0
    %550 = vmatprep.subr.mxu0 0.0
    %551 = vmatpush1.msra.mxu0 0.0
    %552 = vmatprep.subr.mxu0 0.0
    %553 = vmatpush1.msra.mxu0 0.0
    %554 = vmatprep.mubr.f32.mxu0 0.0
    %555 = vmatmul.mubr.f32.gmra.mrb[0].mxu0 %v473
    %v556 = vpop.f32.mrb[0].mxu0
    %v557 = vadd.f32 0.0, %v556
    %v558 = vpop.f32.mrb[0].mxu0
    %559 = vdwg.mxu0
    %560 = vst [vmem:[#allocation7] sm:$0xff] %v557
    // Predicated region
    $region18: #{tpu_custom_call.1} parent=1 // pred_check
      _
    $region19: #{tpu_custom_call.1} parent=1 // pred_check_branch
      %562 = sbr.rel (0) target = $region21
    $region20: #{tpu_custom_call.1} parent=1 // pred_region
      %s564 = ssub.s32 128, 128
      %565 = vsyncadd [#allocation4], %s564
      %s567 = sshll.u32 [#allocation7], 4
      %s568 = int_to_ptr.vmem [resolvable:$true] %s567
      %570 = dma.vmem_to_hbm [thread:$0]  %s568, 128, %s2, [#allocation4]
    $region21: #{tpu_custom_call.1} parent=1 // pred_fallthru
      _
    // Predicated region
    $region22: #{tpu_custom_call.1} parent=1 // pred_check
      _
    $region23: #{tpu_custom_call.1} parent=1 // pred_check_branch
      %572 = sbr.rel (0) target = $region25
    $region24: #{tpu_custom_call.1} parent=1 // pred_region
      %573 = dma.done [#allocation4], 128
    $region25: #{tpu_custom_call.1} parent=1 // pred_fallthru
      _
    %574 = vsyncpa [#allocation3], 1
    %575 = vsyncpa [#allocation6], 1
    %576 = vsyncpa [#allocation4], 1

</llo_original>
